<compile_context>
chip_gen: v6e
topology: v6e:2x2x1
jax: 0.10.0
libtpu: 0.0.40
codegen_flags: <defaults>
</compile_context>

<pallas_src>
import jax
import jax.numpy as jnp
from jax.experimental import pallas as pl
from jax.experimental.pallas import tpu as pltpu


def _round_up(x, m):
    return (x + m - 1) // m * m


def fasttext_kernel(emb_ref, w_ref, b_ref, out_ref, acc_ref):
    # Grid: (batch_tiles, seq_tiles); seq axis is the reduction ("arbitrary").
    # emb_ref: (TB, TS, Dp)  bf16/f32 activation tile streamed from HBM
    # w_ref:   (Dp, Op)      f32, pre-scaled by 1/seq_len, grid-invariant
    # b_ref:   (1, Op)       f32, grid-invariant
    # out_ref: (TB, Op)      f32, written once at the last seq step
    # acc_ref: (TB, Dp)      f32 scratch accumulator
    s = pl.program_id(1)

    @pl.when(s == 0)
    def _():
        acc_ref[...] = jnp.zeros_like(acc_ref)

    # Sequence-sum in f32 (v5e has no bf16 VPU; f32 accumulate is also the
    # accuracy-safe path on v6e/v7x).
    acc_ref[...] += jnp.sum(emb_ref[...].astype(jnp.float32), axis=1)

    @pl.when(s == pl.num_programs(1) - 1)
    def _():
        pooled = acc_ref[...]                       # (TB, Dp); 1/S already in w
        out = jnp.dot(pooled, w_ref[...], preferred_element_type=jnp.float32)
        out_ref[...] = (out + b_ref[...]).astype(out_ref.dtype)


def fasttext_forward(text_ids, embedding_table, fc_weight, fc_bias,
                     *, activation_dtype=jnp.bfloat16,
                     batch_tile=128, seq_tile=128):
    """
    text_ids:        int32   [seq_len, batch]     (torchtext seq-major, like batch.text)
    embedding_table: float32 [vocab, emb_dim]     (row pad_idx is all-zero)
    fc_weight:       float32 [out_dim, emb_dim]   (torch nn.Linear layout)
    fc_bias:         float32 [out_dim]
    returns:         float32 [batch, out_dim]
    """
    S, B = text_ids.shape
    V, D = embedding_table.shape
    O = fc_weight.shape[0]

    # Lane-dense padding: D and O up to multiples of 128.
    Dp = _round_up(D, 128)
    Op = _round_up(O, 128)

    # Tile sizes (multiples of 8 on sublane dims); kept modest so
    # 2x double-buffered activation tiles fit the default scoped VMEM on all
    # of v5e / v6e / v7x (<= 128*128*128*2B * 2 = 8 MiB).
    TB = min(batch_tile, _round_up(B, 8))
    TS = min(seq_tile, _round_up(S, 8))
    Bp = _round_up(B, TB)
    Sp = _round_up(S, TS)

    # Pad the (small) table columns once, cast to the streaming dtype, and
    # gather with batch-major indices so the [B, S, Dp] activation is produced
    # directly — no transpose pass over the big activation. Pad B/S with zero
    # rows (zeros contribute nothing to the sum; mean uses the true S).
    table = jnp.pad(embedding_table, ((0, 0), (0, Dp - D))).astype(activation_dtype)
    embedded = jnp.take(table, text_ids.T, axis=0)                 # [B, S, Dp]
    embedded = jnp.pad(embedded, ((0, Bp - B), (0, Sp - S), (0, 0)))

    # Fold the mean's 1/S into the tiny FC weight; pad weight/bias to lane width.
    w = jnp.zeros((Dp, Op), jnp.float32).at[:D, :O].set(fc_weight.T / S)
    b = jnp.zeros((1, Op), jnp.float32).at[0, :O].set(fc_bias)

    grid = (Bp // TB, Sp // TS)

    out = pl.pallas_call(
        fasttext_kernel,
        out_shape=jax.ShapeDtypeStruct((Bp, Op), jnp.float32),
        grid_spec=pltpu.PrefetchScalarGridSpec(
            num_scalar_prefetch=0,
            grid=grid,
            in_specs=[
                pl.BlockSpec((TB, TS, Dp), lambda bi, si: (bi, si, 0)),
                pl.BlockSpec((Dp, Op), lambda bi, si: (0, 0)),   # VMEM-resident
                pl.BlockSpec((1, Op), lambda bi, si: (0, 0)),    # VMEM-resident
            ],
            out_specs=pl.BlockSpec((TB, Op), lambda bi, si: (bi, 0)),
            scratch_shapes=[pltpu.VMEM((TB, Dp), jnp.float32)],
        ),
        compiler_params=pltpu.CompilerParams(
            dimension_semantics=("parallel", "arbitrary"),
        ),
    )(embedded, w, b)

    return out[:B, :O]


if __name__ == "__main__":
    # Small shapes consistent with the module's forward.
    vocab_size = 32
    embedding_dim = 32
    output_dim = 8
    pad_idx = 1
    seq_len = 8
    batch = 2

    key = jax.random.PRNGKey(0)
    k_emb, k_w, k_b, k_ids = jax.random.split(key, 4)

    # nn.Embedding init ~ N(0, 1), with the padding_idx row zeroed.
    embedding_table = jax.random.normal(
        k_emb, (vocab_size, embedding_dim), dtype=jnp.float32
    )
    embedding_table = embedding_table.at[pad_idx].set(0.0)

    # nn.Linear init ~ U(-1/sqrt(fan_in), 1/sqrt(fan_in)).
    bound = 1.0 / (embedding_dim ** 0.5)
    fc_weight = jax.random.uniform(
        k_w, (output_dim, embedding_dim), minval=-bound, maxval=bound,
        dtype=jnp.float32,
    )
    fc_bias = jax.random.uniform(
        k_b, (output_dim,), minval=-bound, maxval=bound, dtype=jnp.float32
    )

    # batch.text: int ids, shape [seq_len, batch] (seq-major, torchtext style)
    text_ids = jax.random.randint(
        k_ids, (seq_len, batch), minval=0, maxval=vocab_size, dtype=jnp.int32
    )

    # Pure-JAX f32 reference of the module's forward.
    emb_ref = jnp.take(embedding_table, text_ids, axis=0).transpose(1, 0, 2)
    pooled_ref = jnp.mean(emb_ref, axis=1)
    ref = pooled_ref @ fc_weight.T + fc_bias

    # Default (bf16-streamed) path.
    out = fasttext_forward(text_ids, embedding_table, fc_weight, fc_bias)
    out = jax.block_until_ready(out)
    assert out.shape == (batch, output_dim)
    assert jnp.allclose(out, ref, atol=3e-2, rtol=3e-2)

    # f32-streamed path for a tight numerical check of the kernel itself.
    out_f32 = fasttext_forward(
        text_ids, embedding_table, fc_weight, fc_bias,
        activation_dtype=jnp.float32,
    )
    out_f32 = jax.block_until_ready(out_f32)
    assert jnp.allclose(out_f32, ref, atol=1e-5, rtol=1e-5)

    print("KERNEL_OK")
</pallas_src>

<mosaic_0001>
module attributes {stable_mosaic.version = 11 : i64} {
  func.func @fasttext_kernel(%arg0: i32, %arg1: i32, %arg2: memref<8x8x128xbf16, #tpu.memory_space<vmem>>, %arg3: memref<128x128xf32, #tpu.memory_space<vmem>>, %arg4: memref<1x128xf32, #tpu.memory_space<vmem>>, %arg5: memref<8x128xf32, #tpu.memory_space<vmem>>, %arg6: memref<8x128xf32, #tpu.memory_space<vmem>>) attributes {dimension_semantics = [#tpu.dimension_semantics<parallel>, #tpu.dimension_semantics<arbitrary>], iteration_bounds = array<i64: 1, 1>, scalar_prefetch = 0 : i64, scratch_operands = 1 : i64, tpu.core_type = #tpu.core_type<tc>, window_params = [{transform_indices = @transform_0, window_bounds = array<i64: 8, 8, 128>}, {pipeline_mode = #tpu.pipeline_mode<synchronous>, transform_indices = @transform_1, window_bounds = array<i64: 128, 128>}, {pipeline_mode = #tpu.pipeline_mode<synchronous>, transform_indices = @transform_2, window_bounds = array<i64: 1, 128>}, {transform_indices = @transform_3, window_bounds = array<i64: 8, 128>}]} {
    %c0_i32 = arith.constant 0 : i32
    %0 = arith.cmpi eq, %arg1, %c0_i32 : i32
    %1 = arith.extui %0 : i1 to i32
    %c0_i32_0 = arith.constant 0 : i32
    %2 = arith.cmpi ne, %1, %c0_i32_0 : i32
    scf.if %2 {
      %cst_9 = arith.constant 0.000000e+00 : f32
      %12 = vector.broadcast %cst_9 : f32 to vector<8x128xf32>
      %c0_10 = arith.constant 0 : index
      %c0_11 = arith.constant 0 : index
      %13 = vector.load %arg6[%c0_10, %c0_11] : memref<8x128xf32, #tpu.memory_space<vmem>>, vector<8x128xf32>
      tpu.vector_store %arg6[%c0_10, %c0_11], %12 {strides = array<i32>} : memref<8x128xf32, #tpu.memory_space<vmem>>, vector<8x128xf32>,
    } else {
    }
    %c0 = arith.constant 0 : index
    %c0_1 = arith.constant 0 : index
    %3 = vector.load %arg6[%c0, %c0_1] : memref<8x128xf32, #tpu.memory_space<vmem>>, vector<8x128xf32>
    %c0_2 = arith.constant 0 : index
    %c0_3 = arith.constant 0 : index
    %c0_4 = arith.constant 0 : index
    %4 = vector.load %arg2[%c0_2, %c0_3, %c0_4] : memref<8x8x128xbf16, #tpu.memory_space<vmem>>, vector<8x8x128xbf16>
    %5 = arith.extf %4 : vector<8x8x128xbf16> to vector<8x8x128xf32>
    %cst = arith.constant dense<0.000000e+00> : vector<8x128xf32>
    %6 = vector.multi_reduction <add>, %5, %cst [1] : vector<8x8x128xf32> to vector<8x128xf32>
    %7 = arith.addf %3, %6 : vector<8x128xf32>
    %c0_5 = arith.constant 0 : index
    %c0_6 = arith.constant 0 : index
    %8 = vector.load %arg6[%c0_5, %c0_6] : memref<8x128xf32, #tpu.memory_space<vmem>>, vector<8x128xf32>
    tpu.vector_store %arg6[%c0_5, %c0_6], %7 {strides = array<i32>} : memref<8x128xf32, #tpu.memory_space<vmem>>, vector<8x128xf32>,
    %c0_i32_7 = arith.constant 0 : i32
    %9 = arith.cmpi eq, %arg1, %c0_i32_7 : i32
    %10 = arith.extui %9 : i1 to i32
    %c0_i32_8 = arith.constant 0 : i32
    %11 = arith.cmpi ne, %10, %c0_i32_8 : i32
    scf.if %11 {
      %c0_9 = arith.constant 0 : index
      %c0_10 = arith.constant 0 : index
      %12 = vector.load %arg6[%c0_9, %c0_10] : memref<8x128xf32, #tpu.memory_space<vmem>>, vector<8x128xf32>
      %c0_11 = arith.constant 0 : index
      %c0_12 = arith.constant 0 : index
      %13 = vector.load %arg3[%c0_11, %c0_12] : memref<128x128xf32, #tpu.memory_space<vmem>>, vector<128x128xf32>
      %cst_13 = arith.constant dense<0.000000e+00> : vector<8x128xf32>
      %14 = tpu.matmul %12, %13, %cst_13 {dimension_numbers = #tpu.dot_dimension_numbers<[1], [0], [0], [1], [0, 0, 1, 1], [], []>} : vector<8x128xf32>, vector<128x128xf32>, vector<8x128xf32> -> vector<8x128xf32>
      %c0_14 = arith.constant 0 : index
      %c0_15 = arith.constant 0 : index
      %15 = vector.load %arg4[%c0_14, %c0_15] : memref<1x128xf32, #tpu.memory_space<vmem>>, vector<1x128xf32>
      %16 = vector.broadcast %15 : vector<1x128xf32> to vector<8x128xf32>
      %17 = arith.addf %14, %16 : vector<8x128xf32>
      %c0_16 = arith.constant 0 : index
      %c0_17 = arith.constant 0 : index
      %18 = vector.load %arg5[%c0_16, %c0_17] : memref<8x128xf32, #tpu.memory_space<vmem>>, vector<8x128xf32>
      tpu.vector_store %arg5[%c0_16, %c0_17], %17 {strides = array<i32>} : memref<8x128xf32, #tpu.memory_space<vmem>>, vector<8x128xf32>,
    } else {
    }
    return
  }
  func.func @transform_0(%arg0: i32, %arg1: i32) -> (i32, i32, i32) {
    %c0_i32 = arith.constant 0 : i32
    %c0_i32_0 = arith.constant 0 : i32
    return %arg0, %arg1, %c0_i32 : i32, i32, i32
  }
  func.func @transform_1(%arg0: i32, %arg1: i32) -> (i32, i32) {
    %c0_i32 = arith.constant 0 : i32
    %c0_i32_0 = arith.constant 0 : i32
    %c0_i32_1 = arith.constant 0 : i32
    return %c0_i32, %c0_i32_0 : i32, i32
  }
  func.func @transform_2(%arg0: i32, %arg1: i32) -> (i32, i32) {
    %c0_i32 = arith.constant 0 : i32
    %c0_i32_0 = arith.constant 0 : i32
    %c0_i32_1 = arith.constant 0 : i32
    return %c0_i32, %c0_i32_0 : i32, i32
  }
  func.func @transform_3(%arg0: i32, %arg1: i32) -> (i32, i32) {
    %c0_i32 = arith.constant 0 : i32
    %c0_i32_0 = arith.constant 0 : i32
    return %arg0, %c0_i32 : i32, i32
  }
}

</mosaic_0001>

<llo_original>
// kernel: tpu_custom_call.1
$region0: #{tpu_custom_call.1}
  #allocation0 [shape = 'u32[]', space=smem, size = 0x4, offset = 0x4, fixed_abs, tag = 'smem constant byte address 0x4 - core index']
  #allocation1 [shape = 'u32[144,128]{1,0:T(1,128)}', space=vmem, size = 0x12000, scoped, tag = 'internal scratch']
  #allocation2 [shape = 'f32[8,128]{1,0:T(8,128)}', space=vmem, size = 0x1000, scoped, tag = 'scratch operand']
  %s0 = inlined_call_operand.hbm [shape: bf16[8,8,128], index: 0, kind: input, shape index: {}]
  %s1 = inlined_call_operand.hbm [shape: f32[128,128], index: 1, kind: input, shape index: {}]
  %s2 = inlined_call_operand.vmem [shape: f32[1,128], index: 2, kind: input, shape index: {}]
  %s3 = inlined_call_operand.hbm [shape: f32[8,128], index: 3, kind: output, shape index: {}]
  %s4 = sld [smem:[#allocation0]]
  $region38: #{tpu_custom_call.1} parent=0
    _
  %s6 = ssub.s32 1, %s4
  %s7 = scalar_select 0, %s6, %s4
  $region1: #{tpu_custom_call.1} parent=0
    #allocation3 [shape = 'u8[16384]{0}', space=vmem, size = 0x4000, scoped, tag = 'input window, operand 0, single buffered']
    #allocation4 [shape = 's32[1]{0}', space=sflag, size = 0x4, scoped, tag = 'scoped memory for tpu_custom_call.1']
    #allocation5 [shape = 's32[1]{0}', space=sflag, size = 0x4, scoped, tag = 'scoped memory for tpu_custom_call.1']
    #allocation6 [shape = 'u8[65536]{0}', space=vmem, size = 0x10000, scoped, tag = 'input window, operand 1, single buffered']
    #allocation7 [shape = 's32[1]{0}', space=sflag, size = 0x4, scoped, tag = 'scoped memory for tpu_custom_call.1']
    #allocation8 [shape = 'u8[4096]{0}', space=vmem, size = 0x1000, scoped, tag = 'output window, operand 0, single buffered']
    %8 = vsyncpa [#allocation4], 0
    %9 = vsyncpa [#allocation7], 0
    %10 = vsyncpa [#allocation5], 0
    // Predicated region
    $region2: #{tpu_custom_call.1} parent=1 // pred_check
      _
    $region3: #{tpu_custom_call.1} parent=1 // pred_check_branch
      %12 = sbr.rel (0) target = $region5
    $region4: #{tpu_custom_call.1} parent=1 // pred_region
      %s14 = ssub.s32 512, 512
      %15 = vsyncadd [#allocation4], %s14
      %s16 = sshll.u32 [#allocation3], 4
      %s17 = int_to_ptr.vmem [resolvable:$true] %s16
      %22 = dma.hbm_to_vmem [thread:$0]  %s0, 512, %s17, [#allocation4], 64, 64, 4
    $region5: #{tpu_custom_call.1} parent=1 // pred_fallthru
      _
    // Predicated region
    $region6: #{tpu_custom_call.1} parent=1 // pred_check
      _
    $region7: #{tpu_custom_call.1} parent=1 // pred_check_branch
      %24 = sbr.rel (0) target = $region9
    $region8: #{tpu_custom_call.1} parent=1 // pred_region
      %s26 = ssub.s32 2048, 2048
      %27 = vsyncadd [#allocation7], %s26
      %s28 = sshll.u32 [#allocation6], 4
      %s29 = int_to_ptr.vmem [resolvable:$true] %s28
      %34 = dma.hbm_to_vmem [thread:$0]  %s1, 2048, %s29, [#allocation7], 128, 128, 8
    $region9: #{tpu_custom_call.1} parent=1 // pred_fallthru
      _
    // Predicated region
    $region10: #{tpu_custom_call.1} parent=1 // pred_check
      _
    $region11: #{tpu_custom_call.1} parent=1 // pred_check_branch
      %36 = sbr.rel (0) target = $region13
    $region12: #{tpu_custom_call.1} parent=1 // pred_region
      _
    $region13: #{tpu_custom_call.1} parent=1 // pred_fallthru
      _
    // Predicated region
    $region14: #{tpu_custom_call.1} parent=1 // pred_check
      _
    $region15: #{tpu_custom_call.1} parent=1 // pred_check_branch
      %38 = sbr.rel (0) target = $region17
    $region16: #{tpu_custom_call.1} parent=1 // pred_region
      %39 = dma.done [#allocation4], 512
    $region17: #{tpu_custom_call.1} parent=1 // pred_fallthru
      _
    // Predicated region
    $region18: #{tpu_custom_call.1} parent=1 // pred_check
      _
    $region19: #{tpu_custom_call.1} parent=1 // pred_check_branch
      %41 = sbr.rel (0) target = $region21
    $region20: #{tpu_custom_call.1} parent=1 // pred_region
      %42 = dma.done [#allocation7], 2048
    $region21: #{tpu_custom_call.1} parent=1 // pred_fallthru
      _
    %p43 = scmp.eq.s32.totalorder 0, 0
    // Predicated region
    $region22: #{tpu_custom_call.1} parent=1 // pred_check
      %p44 = pneg %p43
    $region23: #{tpu_custom_call.1} parent=1 // pred_check_branch
      %46 = sbr.rel (%p44) target = $region25
    $region24: #{tpu_custom_call.1} parent=1 // pred_region
      %47 = vst [vmem:[#allocation2] sm:$0xff] 0.0
    $region25: #{tpu_custom_call.1} parent=1 // pred_fallthru
      _
    %v48 = vld [vmem:[#allocation2] sm:$0xff]
    %v49 = vld [vmem:[#allocation3] sm:$0xf]
    %v50 = vld [vmem:[#allocation3 + $0x4] sm:$0xf]
    %v51 = vld [vmem:[#allocation3 + $0x8] sm:$0xf]
    %v52 = vld [vmem:[#allocation3 + $0xc] sm:$0xf]
    %v53 = vld [vmem:[#allocation3 + $0x10] sm:$0xf]
    %v54 = vld [vmem:[#allocation3 + $0x14] sm:$0xf]
    %v55 = vld [vmem:[#allocation3 + $0x18] sm:$0xf]
    %v56 = vld [vmem:[#allocation3 + $0x1c] sm:$0xf]
    %v57 = vunpack.c.l.bf16 %v49
    %v58 = vunpack.c.l.bf16 %v50
    %v59 = vunpack.c.l.bf16 %v51
    %v60 = vunpack.c.l.bf16 %v52
    %v61 = vunpack.c.l.bf16 %v53
    %v62 = vunpack.c.l.bf16 %v54
    %v63 = vunpack.c.l.bf16 %v55
    %v64 = vunpack.c.l.bf16 %v56
    %v65 = vrot.slane %v57, 4
    %v66 = vadd.f32 %v57, %v65
    %v67 = vrot.slane %v66, 2
    %v68 = vadd.f32 %v66, %v67
    %v69 = vrot.slane %v68, 1
    %v70 = vadd.f32 %v68, %v69
    %v71 = vrot.slane %v58, 4
    %v72 = vadd.f32 %v58, %v71
    %v73 = vrot.slane %v72, 2
    %v74 = vadd.f32 %v72, %v73
    %v75 = vrot.slane %v74, 1
    %v76 = vadd.f32 %v74, %v75
    %v77 = vrot.slane %v59, 4
    %v78 = vadd.f32 %v59, %v77
    %v79 = vrot.slane %v78, 2
    %v80 = vadd.f32 %v78, %v79
    %v81 = vrot.slane %v80, 1
    %v82 = vadd.f32 %v80, %v81
    %v83 = vrot.slane %v60, 4
    %v84 = vadd.f32 %v60, %v83
    %v85 = vrot.slane %v84, 2
    %v86 = vadd.f32 %v84, %v85
    %v87 = vrot.slane %v86, 1
    %v88 = vadd.f32 %v86, %v87
    %v89 = vrot.slane %v61, 4
    %v90 = vadd.f32 %v61, %v89
    %v91 = vrot.slane %v90, 2
    %v92 = vadd.f32 %v90, %v91
    %v93 = vrot.slane %v92, 1
    %v94 = vadd.f32 %v92, %v93
    %v95 = vrot.slane %v62, 4
    %v96 = vadd.f32 %v62, %v95
    %v97 = vrot.slane %v96, 2
    %v98 = vadd.f32 %v96, %v97
    %v99 = vrot.slane %v98, 1
    %v100 = vadd.f32 %v98, %v99
    %v101 = vrot.slane %v63, 4
    %v102 = vadd.f32 %v63, %v101
    %v103 = vrot.slane %v102, 2
    %v104 = vadd.f32 %v102, %v103
    %v105 = vrot.slane %v104, 1
    %v106 = vadd.f32 %v104, %v105
    %v107 = vrot.slane %v64, 4
    %v108 = vadd.f32 %v64, %v107
    %v109 = vrot.slane %v108, 2
    %v110 = vadd.f32 %v108, %v109
    %v111 = vrot.slane %v110, 1
    %v112 = vadd.f32 %v110, %v111
    %vm121 = vcmask 1041409
    %v122 = vsel %vm121, %v76, %v70
    %vm123 = vcmask 1042434
    %v124 = vsel %vm123, %v82, %v122
    %vm125 = vcmask 1043459
    %v126 = vsel %vm125, %v88, %v124
    %vm127 = vcmask 1044484
    %v128 = vsel %vm127, %v94, %v126
    %vm129 = vcmask 1045509
    %v130 = vsel %vm129, %v100, %v128
    %vm131 = vcmask 1046534
    %v132 = vsel %vm131, %v106, %v130
    %vm133 = vcmask 1047559
    %v134 = vsel %vm133, %v112, %v132
    %v136 = vadd.f32 %v48, %v134
    %137 = vst [vmem:[#allocation2] sm:$0xff] %v136
    // Predicated region
    $region26: #{tpu_custom_call.1} parent=1 // pred_check
      %p138 = pneg %p43
    $region27: #{tpu_custom_call.1} parent=1 // pred_check_branch
      %140 = sbr.rel (%p138) target = $region29
    $region28: #{tpu_custom_call.1} parent=1 // pred_region
      %v141 = vld [vmem:[#allocation2] sm:$0xff]
      %v142 = vld [vmem:[#allocation6] sm:$0xff]
      %v143 = vld [vmem:[#allocation6 + $0x8] sm:$0xff]
      %v144 = vld [vmem:[#allocation6 + $0x10] sm:$0xff]
      %v145 = vld [vmem:[#allocation6 + $0x18] sm:$0xff]
      %v146 = vld [vmem:[#allocation6 + $0x20] sm:$0xff]
      %v147 = vld [vmem:[#allocation6 + $0x28] sm:$0xff]
      %v148 = vld [vmem:[#allocation6 + $0x30] sm:$0xff]
      %v149 = vld [vmem:[#allocation6 + $0x38] sm:$0xff]
      %v150 = vld [vmem:[#allocation6 + $0x40] sm:$0xff]
      %v151 = vld [vmem:[#allocation6 + $0x48] sm:$0xff]
      %v152 = vld [vmem:[#allocation6 + $0x50] sm:$0xff]
      %v153 = vld [vmem:[#allocation6 + $0x58] sm:$0xff]
      %v154 = vld [vmem:[#allocation6 + $0x60] sm:$0xff]
      %v155 = vld [vmem:[#allocation6 + $0x68] sm:$0xff]
      %v156 = vld [vmem:[#allocation6 + $0x70] sm:$0xff]
      %v157 = vld [vmem:[#allocation6 + $0x78] sm:$0xff]
      %v158 = vld [vmem:[%s2] sm:$0x1]
      %v160 = vlaneseq
      %v161 = vshrl.u32 %v160, 7
      %v162 = vsub.s32 0, %v161
      %v163 = vrot.slane %v158, %v162
      %165 = vmatprep.subr.mxu0 0.0
      %166 = vmatpush1.msra.mxu0 %v157
      %167 = vmatprep.subr.mxu0 0.0
      %168 = vmatpush1.msra.mxu0 %v156
      %169 = vmatprep.subr.mxu0 0.0
      %170 = vmatpush1.msra.mxu0 %v155
      %171 = vmatprep.subr.mxu0 0.0
      %172 = vmatpush1.msra.mxu0 %v154
      %173 = vmatprep.subr.mxu0 0.0
      %174 = vmatpush1.msra.mxu0 %v153
      %175 = vmatprep.subr.mxu0 0.0
      %176 = vmatpush1.msra.mxu0 %v152
      %177 = vmatprep.subr.mxu0 0.0
      %178 = vmatpush1.msra.mxu0 %v151
      %179 = vmatprep.subr.mxu0 0.0
      %180 = vmatpush1.msra.mxu0 %v150
      %181 = vmatprep.subr.mxu0 0.0
      %182 = vmatpush1.msra.mxu0 %v149
      %183 = vmatprep.subr.mxu0 0.0
      %184 = vmatpush1.msra.mxu0 %v148
      %185 = vmatprep.subr.mxu0 0.0
      %186 = vmatpush1.msra.mxu0 %v147
      %187 = vmatprep.subr.mxu0 0.0
      %188 = vmatpush1.msra.mxu0 %v146
      %189 = vmatprep.subr.mxu0 0.0
      %190 = vmatpush1.msra.mxu0 %v145
      %191 = vmatprep.subr.mxu0 0.0
      %192 = vmatpush1.msra.mxu0 %v144
      %193 = vmatprep.subr.mxu0 0.0
      %194 = vmatpush1.msra.mxu0 %v143
      %195 = vmatprep.subr.mxu0 0.0
      %196 = vmatpush1.msra.mxu0 %v142
      %197 = vmatprep.subr.mxu0 0.0
      %198 = vmatpush2.msra.mxu0 0.0
      %199 = vmatprep.subr.mxu0 0.0
      %200 = vmatpush2.msra.mxu0 0.0
      %201 = vmatprep.subr.mxu0 0.0
      %202 = vmatpush2.msra.mxu0 0.0
      %203 = vmatprep.subr.mxu0 0.0
      %204 = vmatpush2.msra.mxu0 0.0
      %205 = vmatprep.subr.mxu0 0.0
      %206 = vmatpush2.msra.mxu0 0.0
      %207 = vmatprep.subr.mxu0 0.0
      %208 = vmatpush2.msra.mxu0 0.0
      %209 = vmatprep.subr.mxu0 0.0
      %210 = vmatpush2.msra.mxu0 0.0
      %211 = vmatprep.subr.mxu0 0.0
      %212 = vmatpush2.msra.mxu0 0.0
      %213 = vmatprep.subr.mxu0 0.0
      %214 = vmatpush2.msra.mxu0 0.0
      %215 = vmatprep.subr.mxu0 0.0
      %216 = vmatpush2.msra.mxu0 0.0
      %217 = vmatprep.subr.mxu0 0.0
      %218 = vmatpush2.msra.mxu0 0.0
      %219 = vmatprep.subr.mxu0 0.0
      %220 = vmatpush2.msra.mxu0 0.0
      %221 = vmatprep.subr.mxu0 0.0
      %222 = vmatpush2.msra.mxu0 0.0
      %223 = vmatprep.subr.mxu0 0.0
      %224 = vmatpush2.msra.mxu0 0.0
      %225 = vmatprep.subr.mxu0 0.0
      %226 = vmatpush2.msra.mxu0 0.0
      %227 = vmatprep.subr.mxu0 0.0
      %228 = vmatpush2.msra.mxu0 0.0
      %229 = vmatprep.mubr.f32.mxu0 0.0
      %230 = vmatmul.mubr.f32.gmra.mxu0 %v141
      %v231 = vpop.f32.mrf.mxu0
      %v232 = vadd.f32 %v163, %v231
      %v233 = vpop.f32.mrf.mxu0
      %234 = vdwg.mxu0
      %235 = vst [vmem:[#allocation8] sm:$0xff] %v232
    $region29: #{tpu_custom_call.1} parent=1 // pred_fallthru
      _
    // Predicated region
    $region30: #{tpu_custom_call.1} parent=1 // pred_check
      _
    $region31: #{tpu_custom_call.1} parent=1 // pred_check_branch
      %237 = sbr.rel (0) target = $region33
    $region32: #{tpu_custom_call.1} parent=1 // pred_region
      %s239 = ssub.s32 128, 128
      %240 = vsyncadd [#allocation5], %s239
      %s242 = sshll.u32 [#allocation8], 4
      %s243 = int_to_ptr.vmem [resolvable:$true] %s242
      %245 = dma.vmem_to_hbm [thread:$0]  %s243, 128, %s3, [#allocation5]
    $region33: #{tpu_custom_call.1} parent=1 // pred_fallthru
      _
    // Predicated region
    $region34: #{tpu_custom_call.1} parent=1 // pred_check
      _
    $region35: #{tpu_custom_call.1} parent=1 // pred_check_branch
      %247 = sbr.rel (0) target = $region37
    $region36: #{tpu_custom_call.1} parent=1 // pred_region
      %248 = dma.done [#allocation5], 128
    $region37: #{tpu_custom_call.1} parent=1 // pred_fallthru
      _
    %249 = vsyncpa [#allocation4], 1
    %250 = vsyncpa [#allocation7], 1
    %251 = vsyncpa [#allocation5], 1

</llo_original>
